<compile_context>
chip_gen: v7x
topology: tpu7x:2x2x1
jax: 0.10.0
libtpu: 0.0.40
codegen_flags: <defaults>
</compile_context>

<pallas_src>
import jax
import jax.numpy as jnp
from jax import lax
from jax.experimental import pallas as pl
from jax.experimental.pallas import tpu as pltpu


def cfg_denoiser_kernel(cs_ref, sigma_ref, x_ref, w_big_ref, wc_rows_ref,
                        pooled_u_ref, pooled_c_ref, out_ref):
    """Fused CFG denoise step on a (B*C, H*W) lane/sublane-dense latent slab.

    Inputs (all tiny except x):
      cs_ref        (1,)      SMEM   cond_scale
      sigma_ref     (BC, 1)   VMEM   sigma repeated per channel row
      x_ref         (BC, HW)  VMEM   latents, dense (8, 256) slab
      w_big_ref     (BC, BC)  VMEM   block-diagonal  I_B (x) Wx
      wc_rows_ref   (BC, D)   VMEM   Wc tiled per batch (row r -> Wc[r % C])
      pooled_u_ref  (BC, D)   VMEM   mean_T(uncond) expanded per channel row
      pooled_c_ref  (BC, D)   VMEM   mean_T(cond)   expanded per channel row
    """
    f32 = jnp.float32
    cs = cs_ref[0]

    # Classifier-free-guidance mix: e_u + (e_c - e_u) * cond_scale, folded
    # (exactly, by linearity of the inner model) onto the pooled cond vectors.
    pooled_mix = pooled_u_ref[...] + cs * (pooled_c_ref[...] - pooled_u_ref[...])   # (BC, D)

    # Single conditioning projection: proj_row[r] = Wc[r % C, :] . pooled_mix[r//C, :]
    # (elementwise mul on one vreg + lane reduce; no MXU round trip, no one-hots).
    proj_row = jnp.sum(wc_rows_ref[...] * pooled_mix, axis=-1, keepdims=True)       # (BC, 1)

    # Per-row sigma scaling: rsqrt goes to the EUP slot (co-issues with MXU below).
    sig = sigma_ref[...]                                                            # (BC, 1)
    scale_row = lax.rsqrt(sig * sig + 1.0)                                          # (BC, 1)

    # Shared inner-model channel mix for the whole (collapsed) batch:
    # ONE MXU matmul on the dense slab using the precomputed block-diag weight.
    h = jnp.dot(w_big_ref[...], x_ref[...], preferred_element_type=f32)             # (BC, HW)

    # out = e_u + (e_c - e_u) * cond_scale — one dense (8, 256) unmasked store.
    out_ref[...] = (scale_row * h + proj_row).astype(out_ref.dtype)


@jax.jit
def cfg_denoiser_forward(x, sigma, uncond, cond, cond_scale, wx, wc):
    """Exact semantics of CFGDenoiser.forward with the synthetic inner model."""
    B, C, H, W = x.shape
    HW = H * W
    BC = B * C

    f32 = jnp.float32
    x2d = x.reshape(BC, HW).astype(f32)                                # (8, 256) dense slab

    # Tiny wrapper-side prep (fuses into a handful of trivial XLA ops):
    sigma_rows = jnp.repeat(sigma.astype(f32), C).reshape(BC, 1)       # (BC, 1)
    w_big = jnp.kron(jnp.eye(B, dtype=f32), wx.astype(f32))            # (BC, BC) block-diag
    wc_rows = jnp.tile(wc.astype(f32), (B, 1))                         # (BC, D)
    pooled_u_rows = jnp.repeat(jnp.mean(uncond.astype(f32), axis=1), C, axis=0)   # (BC, D)
    pooled_c_rows = jnp.repeat(jnp.mean(cond.astype(f32), axis=1), C, axis=0)     # (BC, D)
    cs = jnp.reshape(jnp.asarray(cond_scale, f32), (1,))

    out2d = pl.pallas_call(
        cfg_denoiser_kernel,
        out_shape=jax.ShapeDtypeStruct((BC, HW), f32),
        # No grid: single invocation, whole (tiny) working set resident in VMEM.
        in_specs=[
            pl.BlockSpec(memory_space=pltpu.MemorySpace.SMEM),   # cond_scale (1,)
            pl.BlockSpec(memory_space=pltpu.MemorySpace.VMEM),   # sigma_rows (BC, 1)
            pl.BlockSpec(memory_space=pltpu.MemorySpace.VMEM),   # x2d        (BC, HW)
            pl.BlockSpec(memory_space=pltpu.MemorySpace.VMEM),   # w_big      (BC, BC)
            pl.BlockSpec(memory_space=pltpu.MemorySpace.VMEM),   # wc_rows    (BC, D)
            pl.BlockSpec(memory_space=pltpu.MemorySpace.VMEM),   # pooled_u   (BC, D)
            pl.BlockSpec(memory_space=pltpu.MemorySpace.VMEM),   # pooled_c   (BC, D)
        ],
        out_specs=pl.BlockSpec(memory_space=pltpu.MemorySpace.VMEM),
    )(cs, sigma_rows, x2d, w_big, wc_rows, pooled_u_rows, pooled_c_rows)

    return out2d.reshape(B, C, H, W)


def _reference(x, sigma, uncond, cond, cond_scale, wx, wc):
    """Pure-JAX reference for the ORIGINAL (un-fused, doubled-batch) forward."""
    B, C, H, W = x.shape
    HW = H * W
    xf = x.reshape(B, C, HW)
    x_in = jnp.concatenate([xf, xf], 0)
    s_in = jnp.concatenate([sigma, sigma], 0)
    c_in = jnp.concatenate([uncond, cond], 0)
    scale = lax.rsqrt(s_in * s_in + 1.0)[:, None, None]
    h = jnp.einsum("ck,bkh->bch", wx, x_in)
    proj = jnp.einsum("cd,bd->bc", wc, jnp.mean(c_in, axis=1))[:, :, None]
    eps = scale * h + proj
    e_u, e_c = eps[:B], eps[B:]
    return (e_u + (e_c - e_u) * cond_scale).reshape(B, C, H, W)


if __name__ == "__main__":
    key = jax.random.PRNGKey(0)
    k_x, k_s, k_u, k_c, k_wx, k_wc = jax.random.split(key, 6)

    B, C, H, W = 2, 4, 16, 16      # latent:  (2, 4, 16, 16)
    T, D = 8, 32                   # cond:    (2, 8, 32)

    x = jax.random.normal(k_x, (B, C, H, W), jnp.float32)
    sigma = jax.random.uniform(k_s, (B,), jnp.float32, 0.5, 2.0)
    uncond = jax.random.normal(k_u, (B, T, D), jnp.float32)
    cond = jax.random.normal(k_c, (B, T, D), jnp.float32)
    cond_scale = 7.5

    # deterministic synthetic "inner model" parameters
    wx = jax.random.normal(k_wx, (C, C), jnp.float32) * 0.5
    wc = jax.random.normal(k_wc, (C, D), jnp.float32) * 0.1

    out = cfg_denoiser_forward(x, sigma, uncond, cond, cond_scale, wx, wc)
    out = jax.block_until_ready(out)

    ref = _reference(x, sigma, uncond, cond, cond_scale, wx, wc)
    assert out.shape == (B, C, H, W)
    assert jnp.allclose(out, ref, rtol=1e-3, atol=1e-3), "mismatch vs reference"

    print("KERNEL_OK")
</pallas_src>

<mosaic_0001>
module attributes {stable_mosaic.version = 11 : i64} {
  func.func @cfg_denoiser_kernel(%arg0: memref<1xf32, #tpu.memory_space<smem>>, %arg1: memref<8x1xf32, #tpu.memory_space<vmem>>, %arg2: memref<8x256xf32, #tpu.memory_space<vmem>>, %arg3: memref<8x8xf32, #tpu.memory_space<vmem>>, %arg4: memref<8x32xf32, #tpu.memory_space<vmem>>, %arg5: memref<8x32xf32, #tpu.memory_space<vmem>>, %arg6: memref<8x32xf32, #tpu.memory_space<vmem>>, %arg7: memref<8x256xf32, #tpu.memory_space<vmem>>) attributes {dimension_semantics = [], scalar_prefetch = 0 : i64, scratch_operands = 0 : i64, tpu.core_type = #tpu.core_type<tc>} {
    %c0 = arith.constant 0 : index
    %0 = memref.load %arg0[%c0] : memref<1xf32, #tpu.memory_space<smem>>
    %c0_0 = arith.constant 0 : index
    %c0_1 = arith.constant 0 : index
    %1 = vector.load %arg5[%c0_0, %c0_1] : memref<8x32xf32, #tpu.memory_space<vmem>>, vector<8x32xf32>
    %c0_2 = arith.constant 0 : index
    %c0_3 = arith.constant 0 : index
    %2 = vector.load %arg6[%c0_2, %c0_3] : memref<8x32xf32, #tpu.memory_space<vmem>>, vector<8x32xf32>
    %c0_4 = arith.constant 0 : index
    %c0_5 = arith.constant 0 : index
    %3 = vector.load %arg5[%c0_4, %c0_5] : memref<8x32xf32, #tpu.memory_space<vmem>>, vector<8x32xf32>
    %4 = arith.subf %2, %3 : vector<8x32xf32>
    %5 = vector.broadcast %0 : f32 to vector<8x32xf32>
    %6 = arith.mulf %5, %4 : vector<8x32xf32>
    %7 = arith.addf %1, %6 : vector<8x32xf32>
    %c0_6 = arith.constant 0 : index
    %c0_7 = arith.constant 0 : index
    %8 = vector.load %arg4[%c0_6, %c0_7] : memref<8x32xf32, #tpu.memory_space<vmem>>, vector<8x32xf32>
    %9 = arith.mulf %8, %7 : vector<8x32xf32>
    %cst = arith.constant dense<0.000000e+00> : vector<8xf32>
    %10 = vector.multi_reduction <add>, %9, %cst [1] : vector<8x32xf32> to vector<8xf32>
    %11 = vector.shape_cast %10 : vector<8xf32> to vector<8x1xf32>
    %c0_8 = arith.constant 0 : index
    %c0_9 = arith.constant 0 : index
    %12 = vector.load %arg1[%c0_8, %c0_9] : memref<8x1xf32, #tpu.memory_space<vmem>>, vector<8x1xf32>
    %13 = arith.mulf %12, %12 : vector<8x1xf32>
    %cst_10 = arith.constant 1.000000e+00 : f32
    %14 = vector.broadcast %cst_10 : f32 to vector<8x1xf32>
    %15 = arith.addf %13, %14 : vector<8x1xf32>
    %16 = math.rsqrt %15 : vector<8x1xf32>
    %c0_11 = arith.constant 0 : index
    %c0_12 = arith.constant 0 : index
    %17 = vector.load %arg3[%c0_11, %c0_12] : memref<8x8xf32, #tpu.memory_space<vmem>>, vector<8x8xf32>
    %c0_13 = arith.constant 0 : index
    %c0_14 = arith.constant 0 : index
    %18 = vector.load %arg2[%c0_13, %c0_14] : memref<8x256xf32, #tpu.memory_space<vmem>>, vector<8x256xf32>
    %cst_15 = arith.constant dense<0.000000e+00> : vector<8x256xf32>
    %19 = tpu.matmul %17, %18, %cst_15 {dimension_numbers = #tpu.dot_dimension_numbers<[1], [0], [0], [1], [0, 0, 1, 1], [], []>} : vector<8x8xf32>, vector<8x256xf32>, vector<8x256xf32> -> vector<8x256xf32>
    %20 = vector.broadcast %16 : vector<8x1xf32> to vector<8x256xf32>
    %21 = arith.mulf %20, %19 : vector<8x256xf32>
    %22 = vector.broadcast %11 : vector<8x1xf32> to vector<8x256xf32>
    %23 = arith.addf %21, %22 : vector<8x256xf32>
    %c0_16 = arith.constant 0 : index
    %c0_17 = arith.constant 0 : index
    %24 = vector.load %arg7[%c0_16, %c0_17] : memref<8x256xf32, #tpu.memory_space<vmem>>, vector<8x256xf32>
    tpu.vector_store %arg7[%c0_16, %c0_17], %23 {strides = array<i32>} : memref<8x256xf32, #tpu.memory_space<vmem>>, vector<8x256xf32>,
    return
  }
}

</mosaic_0001>

<llo_original>
// kernel: cfg_denoiser_forward.1
$region0: #{cfg_denoiser_forward.1}
  #allocation0 [shape = 'u32[]', space=smem, size = 0x4, offset = 0x4, fixed_abs, tag = 'smem constant byte address 0x4 - core index']
  #allocation1 [shape = 'u32[144,128]{1,0:T(1,128)}', space=vmem, size = 0x12000, scoped, tag = 'internal scratch']
  #allocation2 [shape = 'f32[1]{0:T(128)S(6)}', space=smem, size = 0x200, scoped, tag = 'scoped memory for cfg_denoiser_forward.1']
  %s0 = inlined_call_operand.<no memory space> [shape: f32[1], index: 0, kind: input, shape index: {}]
  %s1 = inlined_call_operand.vmem [shape: f32[8,1], index: 1, kind: input, shape index: {}]
  %s2 = inlined_call_operand.vmem [shape: f32[8,256], index: 2, kind: input, shape index: {}]
  %s3 = inlined_call_operand.vmem [shape: f32[8,8], index: 3, kind: input, shape index: {}]
  %s4 = inlined_call_operand.vmem [shape: f32[8,32], index: 4, kind: input, shape index: {}]
  %s5 = inlined_call_operand.vmem [shape: f32[8,32], index: 5, kind: input, shape index: {}]
  %s6 = inlined_call_operand.vmem [shape: f32[8,32], index: 6, kind: input, shape index: {}]
  %s7 = inlined_call_operand.vmem [shape: f32[8,256], index: 7, kind: output, shape index: {}]
  %s8 = sld [smem:[#allocation0]]
  $region38: #{cfg_denoiser_forward.1} parent=0
    _
  %s10 = ssub.s32 1, %s8
  %s11 = scalar_select 0, %s10, %s8
  %12 = sst [smem:[#allocation2]] %s0
  // Predicated region
  $region2: #{cfg_denoiser_forward.1} parent=0 // pred_check
    _
  $region3: #{cfg_denoiser_forward.1} parent=0 // pred_check_branch
    %14 = sbr.rel (0) target = $region5
  $region4: #{cfg_denoiser_forward.1} parent=0 // pred_region
    _
  $region5: #{cfg_denoiser_forward.1} parent=0 // pred_fallthru
    _
  // Predicated region
  $region6: #{cfg_denoiser_forward.1} parent=0 // pred_check
    _
  $region7: #{cfg_denoiser_forward.1} parent=0 // pred_check_branch
    %16 = sbr.rel (0) target = $region9
  $region8: #{cfg_denoiser_forward.1} parent=0 // pred_region
    _
  $region9: #{cfg_denoiser_forward.1} parent=0 // pred_fallthru
    _
  // Predicated region
  $region10: #{cfg_denoiser_forward.1} parent=0 // pred_check
    _
  $region11: #{cfg_denoiser_forward.1} parent=0 // pred_check_branch
    %18 = sbr.rel (0) target = $region13
  $region12: #{cfg_denoiser_forward.1} parent=0 // pred_region
    _
  $region13: #{cfg_denoiser_forward.1} parent=0 // pred_fallthru
    _
  // Predicated region
  $region14: #{cfg_denoiser_forward.1} parent=0 // pred_check
    _
  $region15: #{cfg_denoiser_forward.1} parent=0 // pred_check_branch
    %20 = sbr.rel (0) target = $region17
  $region16: #{cfg_denoiser_forward.1} parent=0 // pred_region
    _
  $region17: #{cfg_denoiser_forward.1} parent=0 // pred_fallthru
    _
  // Predicated region
  $region18: #{cfg_denoiser_forward.1} parent=0 // pred_check
    _
  $region19: #{cfg_denoiser_forward.1} parent=0 // pred_check_branch
    %22 = sbr.rel (0) target = $region21
  $region20: #{cfg_denoiser_forward.1} parent=0 // pred_region
    _
  $region21: #{cfg_denoiser_forward.1} parent=0 // pred_fallthru
    _
  // Predicated region
  $region22: #{cfg_denoiser_forward.1} parent=0 // pred_check
    _
  $region23: #{cfg_denoiser_forward.1} parent=0 // pred_check_branch
    %24 = sbr.rel (0) target = $region25
  $region24: #{cfg_denoiser_forward.1} parent=0 // pred_region
    _
  $region25: #{cfg_denoiser_forward.1} parent=0 // pred_fallthru
    _
  // Predicated region
  $region26: #{cfg_denoiser_forward.1} parent=0 // pred_check
    _
  $region27: #{cfg_denoiser_forward.1} parent=0 // pred_check_branch
    %26 = sbr.rel (0) target = $region29
  $region28: #{cfg_denoiser_forward.1} parent=0 // pred_region
    _
  $region29: #{cfg_denoiser_forward.1} parent=0 // pred_fallthru
    _
  %s27 = sld [smem:[#allocation2]]
  %v28 = vld [vmem:[%s5] sm:$0xff]
  %v29 = vld [vmem:[%s6] sm:$0xff]
  %v30 = vsub.f32 %v29, %v28
  %v31 = vstv %s27
  %v32 = vmul.f32 %v31, %v30
  %v33 = vadd.f32 %v28, %v32
  %v34 = vld [vmem:[%s4] sm:$0xff]
  %v35 = vmul.f32 %v34, %v33
  %vm36 = vcmask 261120
  %v37 = vsel %vm36, %v35, 0.0
  %38 = vadd.xlane.f32.xlu0 %v37
  %v39 = vpop.xlane.xlu0 %38
  %v40 = vld [vmem:[%s1] sm:$0xff]
  %v41 = vmul.f32 %v40, %v40
  %v42 = vadd.f32 %v41, 1.0
  %v43 = vrsqrt.pop %v42
  %v44 = vld [vmem:[%s3] sm:$0xff]
  %v45 = vld [vmem:[%s2] sm:$0xff]
  %v46 = vld [vmem:[%s2 + $0x8] sm:$0xff]
  %vm47 = vcmask 64512
  %v49 = vsel %vm47, %v44, 0
  %51 = vmatprep.subr.mxu0 %v46
  %52 = vmatpush1.msra.mxu0 %v45
  %53 = vmatprep.subr.mxu0 0.0
  %54 = vmatpush1.msra.mxu0 0.0
  %55 = vmatprep.subr.mxu0 0.0
  %56 = vmatpush1.msra.mxu0 0.0
  %57 = vmatprep.subr.mxu0 0.0
  %58 = vmatpush1.msra.mxu0 0.0
  %59 = vmatprep.subr.mxu0 0.0
  %60 = vmatpush1.msra.mxu0 0.0
  %61 = vmatprep.subr.mxu0 0.0
  %62 = vmatpush1.msra.mxu0 0.0
  %63 = vmatprep.subr.mxu0 0.0
  %64 = vmatpush1.msra.mxu0 0.0
  %65 = vmatprep.subr.mxu0 0.0
  %66 = vmatpush1.msra.mxu0 0.0
  %67 = vmatprep.subr.mxu0 0.0
  %68 = vmatpush1.msra.mxu0 0.0
  %69 = vmatprep.subr.mxu0 0.0
  %70 = vmatpush1.msra.mxu0 0.0
  %71 = vmatprep.subr.mxu0 0.0
  %72 = vmatpush1.msra.mxu0 0.0
  %73 = vmatprep.subr.mxu0 0.0
  %74 = vmatpush1.msra.mxu0 0.0
  %75 = vmatprep.subr.mxu0 0.0
  %76 = vmatpush1.msra.mxu0 0.0
  %77 = vmatprep.subr.mxu0 0.0
  %78 = vmatpush1.msra.mxu0 0.0
  %79 = vmatprep.subr.mxu0 0.0
  %80 = vmatpush1.msra.mxu0 0.0
  %81 = vmatprep.subr.mxu0 0.0
  %82 = vmatpush1.msra.mxu0 0.0
  %83 = vmatprep.subr.mxu0 0.0
  %84 = vmatpush1.msra.mxu0 0.0
  %85 = vmatprep.subr.mxu0 0.0
  %86 = vmatpush1.msra.mxu0 0.0
  %87 = vmatprep.subr.mxu0 0.0
  %88 = vmatpush1.msra.mxu0 0.0
  %89 = vmatprep.subr.mxu0 0.0
  %90 = vmatpush1.msra.mxu0 0.0
  %91 = vmatprep.subr.mxu0 0.0
  %92 = vmatpush1.msra.mxu0 0.0
  %93 = vmatprep.subr.mxu0 0.0
  %94 = vmatpush1.msra.mxu0 0.0
  %95 = vmatprep.subr.mxu0 0.0
  %96 = vmatpush1.msra.mxu0 0.0
  %97 = vmatprep.subr.mxu0 0.0
  %98 = vmatpush1.msra.mxu0 0.0
  %99 = vmatprep.subr.mxu0 0.0
  %100 = vmatpush1.msra.mxu0 0.0
  %101 = vmatprep.subr.mxu0 0.0
  %102 = vmatpush1.msra.mxu0 0.0
  %103 = vmatprep.subr.mxu0 0.0
  %104 = vmatpush1.msra.mxu0 0.0
  %105 = vmatprep.subr.mxu0 0.0
  %106 = vmatpush1.msra.mxu0 0.0
  %107 = vmatprep.subr.mxu0 0.0
  %108 = vmatpush1.msra.mxu0 0.0
  %109 = vmatprep.subr.mxu0 0.0
  %110 = vmatpush1.msra.mxu0 0.0
  %111 = vmatprep.subr.mxu0 0.0
  %112 = vmatpush1.msra.mxu0 0.0
  %113 = vmatprep.subr.mxu0 0.0
  %114 = vmatpush1.msra.mxu0 0.0
  %115 = vmatprep.mubr.f32.mxu0 0.0
  %116 = vmatmul.mubr.f32.gmra.mrb[0].mxu0 %v49
  %v117 = vpop.f32.mrb[0].mxu0
  %v118 = vadd.f32 0.0, %v117
  %v119 = vpop.f32.mrb[0].mxu0
  %v120 = vadd.f32 0.0, %v119
  %121 = vdwg.mxu0
  %123 = vset.pattern.permute.xlu0 0
  %124 = vperm.xlu0 %123, %v43
  %v125 = vpop.permute.xlu0 %124
  %v127 = vmul.f32 %v125, %v118
  %v128 = vmul.f32 %v125, %v120
  %v129 = vadd.f32 %v127, %v39
  %v130 = vadd.f32 %v128, %v39
  %131 = vst [vmem:[%s7] sm:$0xff] %v129
  %132 = vst [vmem:[%s7 + $0x8] sm:$0xff] %v130
  // Predicated region
  $region30: #{cfg_denoiser_forward.1} parent=0 // pred_check
    _
  $region31: #{cfg_denoiser_forward.1} parent=0 // pred_check_branch
    %134 = sbr.rel (0) target = $region33
  $region32: #{cfg_denoiser_forward.1} parent=0 // pred_region
    _
  $region33: #{cfg_denoiser_forward.1} parent=0 // pred_fallthru
    _
  // Predicated region
  $region34: #{cfg_denoiser_forward.1} parent=0 // pred_check
    _
  $region35: #{cfg_denoiser_forward.1} parent=0 // pred_check_branch
    %136 = sbr.rel (0) target = $region37
  $region36: #{cfg_denoiser_forward.1} parent=0 // pred_region
    _
  $region37: #{cfg_denoiser_forward.1} parent=0 // pred_fallthru
    _

</llo_original>
